<compile_context>
chip_gen: v5e
topology: v5e:2x2
jax: 0.10.0
libtpu: 0.0.40
codegen_flags: <defaults>
</compile_context>

<pallas_src>
import jax
import jax.numpy as jnp
from jax.experimental import pallas as pl
from jax.experimental.pallas import tpu as pltpu

# Controller hyperparameters (small, demo-sized).
A_DIM = 4                                     # self.a (actions)
B_OPT = 3                                     # self.b (options)
S_DIM = 256                                   # flattened state size
H_DIM = 128                                   # hidden width of the synthetic net
OUT_DIM = B_OPT * A_DIM + 2 * B_OPT + B_OPT   # b*a + 2*b + b = 21
OUT_PAD = 32                                  # padded output lane width (full-dim block)

_HI = jax.lax.Precision.HIGHEST


def _group_bounds():
    """Static (lo, hi) lane ranges of the 2*b+1 softmax groups in the 21-wide output."""
    bounds = []
    off = 0
    for _ in range(B_OPT):                 # b action groups of width a
        bounds.append((off, off + A_DIM))
        off += A_DIM
    for _ in range(B_OPT):                 # b stop groups of width 2
        bounds.append((off, off + 2))
        off += 2
    bounds.append((off, off + B_OPT))      # one start group of width b
    off += B_OPT
    assert off == OUT_DIM
    return tuple(bounds)


GROUP_BOUNDS = _group_bounds()


def _cdiv(a, b):
    return -(-a // b)


def _round_up(x, m):
    return ((x + m - 1) // m) * m


def homo_controller_kernel(x_ref, w1_ref, b1_ref, w2_ref, b2_ref, out_ref):
    # --- net(x): 2-layer MLP, bf16 operands, f32 accumulation on the MXU ---
    x = x_ref[...].astype(jnp.bfloat16)          # f32 -> bf16 cast on the VPU (slack)
    h = jnp.dot(x, w1_ref[...], preferred_element_type=jnp.float32)
    h = jnp.maximum(h + b1_ref[...], 0.0)
    logits = jnp.dot(h.astype(jnp.bfloat16), w2_ref[...],
                     preferred_element_type=jnp.float32) + b2_ref[...]
    # logits: (tn, OUT_PAD) f32; lanes >= OUT_DIM are zero-padded and never used.

    # --- exact grouped log_softmax, entirely off the MXU (XLU/VPU epilogue) ---
    lane = jax.lax.broadcasted_iota(jnp.int32, (1, OUT_PAD), 1)
    masks_b = [jnp.logical_and(lane >= lo, lane < hi) for lo, hi in GROUP_BOUNDS]
    masks_f = [m.astype(jnp.float32) for m in masks_b]

    # Per-group max, broadcast back to each lane of its group.
    max_b = jnp.zeros_like(logits)
    for m_b, m_f in zip(masks_b, masks_f):
        mg = jnp.max(jnp.where(m_b, logits, -jnp.inf), axis=-1, keepdims=True)
        max_b = max_b + mg * m_f
    s = logits - max_b                           # per-group shifted (pad lanes harmless)
    e = jnp.exp(s)

    # Per-group sum-of-exp (>= 1 since the group max contributes exp(0)=1).
    lse_b = jnp.zeros_like(logits)
    for m_f in masks_f:
        sg = jnp.sum(e * m_f, axis=-1, keepdims=True)
        lse_b = lse_b + jnp.log(sg) * m_f

    out_ref[...] = s - lse_b


@jax.jit
def _forward_b_core(s_i_batch, params):
    """Jitted core: returns only the three log-prob arrays."""
    B, T, S = s_i_batch.shape
    assert S == S_DIM
    N = B * T

    # Adaptive row tile: big tiles, but keep >= 2 grid blocks (v7x two TCs).
    tn = min(2048, max(8, _round_up(_cdiv(N, 2), 8)))
    n_blocks = _cdiv(N, tn)
    n_pad = n_blocks * tn

    w1, b1, w2, b2 = params

    # x stays f32 in HBM (cast to bf16 in-kernel); weights are bf16, biases f32.
    x = s_i_batch.reshape(N, S)
    w1b = w1.astype(jnp.bfloat16)
    w2b = jnp.pad(w2, ((0, 0), (0, OUT_PAD - OUT_DIM))).astype(jnp.bfloat16)
    b2p = jnp.pad(b2, ((0, 0), (0, OUT_PAD - OUT_DIM))).astype(jnp.float32)
    b1f = b1.astype(jnp.float32)

    slab = pl.pallas_call(
        homo_controller_kernel,
        out_shape=jax.ShapeDtypeStruct((n_pad, OUT_PAD), jnp.float32),
        grid_spec=pltpu.PrefetchScalarGridSpec(
            num_scalar_prefetch=0,
            grid=(n_blocks,),
            in_specs=[
                pl.BlockSpec((tn, S_DIM), lambda i: (i, 0)),        # x tile (f32)
                pl.BlockSpec((S_DIM, H_DIM), lambda i: (0, 0)),     # W1 (resident)
                pl.BlockSpec((1, H_DIM), lambda i: (0, 0)),         # b1
                pl.BlockSpec((H_DIM, OUT_PAD), lambda i: (0, 0)),   # W2 (zero-padded)
                pl.BlockSpec((1, OUT_PAD), lambda i: (0, 0)),       # b2 (zero-padded)
            ],
            out_specs=pl.BlockSpec((tn, OUT_PAD), lambda i: (i, 0)),
        ),
        compiler_params=pltpu.CompilerParams(
            dimension_semantics=("parallel",)),
    )(x, w1b, b1f, w2b, b2p)

    out = slab[:N, :OUT_DIM]
    action_logps = out[:, :B_OPT * A_DIM].reshape(B, T, B_OPT, A_DIM)
    stop_logps = out[:, B_OPT * A_DIM:B_OPT * A_DIM + 2 * B_OPT].reshape(
        B, T, B_OPT, 2)
    start_logps = out[:, B_OPT * A_DIM + 2 * B_OPT:OUT_DIM].reshape(B, T, B_OPT)
    return action_logps, stop_logps, start_logps


def homo_controller_forward_b(s_i_batch, params):
    """Mirrors HomoController.forward_b's return signature (placeholders un-jitted)."""
    action_logps, stop_logps, start_logps = _forward_b_core(s_i_batch, params)
    return (action_logps, stop_logps, start_logps, None, 'None', None)


def _reference_forward_b(s_i_batch, params):
    """Pure-JAX reference mirroring the PyTorch forward_b (same bf16 rounding)."""
    B, T, S = s_i_batch.shape
    w1, b1, w2, b2 = params
    x = s_i_batch.reshape(B * T, S).astype(jnp.bfloat16).astype(jnp.float32)
    w1b = w1.astype(jnp.bfloat16).astype(jnp.float32)
    w2b = w2.astype(jnp.bfloat16).astype(jnp.float32)
    h = jnp.maximum(jnp.matmul(x, w1b, precision=_HI) + b1, 0.0)
    h = h.astype(jnp.bfloat16).astype(jnp.float32)
    out = (jnp.matmul(h, w2b, precision=_HI) + b2).reshape(B, T, -1)
    action = out[:, :, :B_OPT * A_DIM].reshape(B, T, B_OPT, A_DIM)
    stop = out[:, :, B_OPT * A_DIM:B_OPT * A_DIM + 2 * B_OPT].reshape(B, T, B_OPT, 2)
    start = out[:, :, B_OPT * A_DIM + 2 * B_OPT:]
    return (jax.nn.log_softmax(action, axis=3),
            jax.nn.log_softmax(stop, axis=3),
            jax.nn.log_softmax(start, axis=2))


def init_params(key):
    k1, k2, k3, k4 = jax.random.split(key, 4)
    w1 = jax.random.normal(k1, (S_DIM, H_DIM), jnp.float32) * 0.05
    b1 = jax.random.normal(k2, (1, H_DIM), jnp.float32) * 0.01
    w2 = jax.random.normal(k3, (H_DIM, OUT_DIM), jnp.float32) * 0.05
    b2 = jax.random.normal(k4, (1, OUT_DIM), jnp.float32) * 0.01
    return w1, b1, w2, b2


def _check(s_i_batch, params):
    B, T, _ = s_i_batch.shape
    action_logps, stop_logps, start_logps, _, _, _ = homo_controller_forward_b(
        s_i_batch, params)
    jax.block_until_ready((action_logps, stop_logps, start_logps))
    ref_a, ref_s, ref_st = _reference_forward_b(s_i_batch, params)
    assert action_logps.shape == (B, T, B_OPT, A_DIM)
    assert stop_logps.shape == (B, T, B_OPT, 2)
    assert start_logps.shape == (B, T, B_OPT)
    assert jnp.allclose(action_logps, ref_a, atol=1e-3, rtol=1e-3)
    assert jnp.allclose(stop_logps, ref_s, atol=1e-3, rtol=1e-3)
    assert jnp.allclose(start_logps, ref_st, atol=1e-3, rtol=1e-3)


if __name__ == "__main__":
    key = jax.random.PRNGKey(0)
    k_params, k_x1, k_x2 = jax.random.split(key, 3)
    params = init_params(k_params)

    # Small shape from the module spec (B=2, T=8) -> 2 tiny grid blocks.
    _check(jax.random.normal(k_x1, (2, 8, S_DIM), jnp.float32), params)
    # Larger shape so the grid has multiple substantial tiles (tn=512, 2 blocks).
    _check(jax.random.normal(k_x2, (4, 256, S_DIM), jnp.float32), params)

    print("KERNEL_OK")
</pallas_src>

<mosaic_0001>
module attributes {stable_mosaic.version = 11 : i64} {
  func.func @homo_controller_kernel(%arg0: i32, %arg1: memref<8x256xf32, #tpu.memory_space<vmem>>, %arg2: memref<256x128xbf16, #tpu.memory_space<vmem>>, %arg3: memref<1x128xf32, #tpu.memory_space<vmem>>, %arg4: memref<128x32xbf16, #tpu.memory_space<vmem>>, %arg5: memref<1x32xf32, #tpu.memory_space<vmem>>, %arg6: memref<8x32xf32, #tpu.memory_space<vmem>>) attributes {dimension_semantics = [#tpu.dimension_semantics<parallel>], iteration_bounds = array<i64: 2>, scalar_prefetch = 0 : i64, scratch_operands = 0 : i64, tpu.core_type = #tpu.core_type<tc>, window_params = [{transform_indices = @transform_0, window_bounds = array<i64: 8, 256>}, {pipeline_mode = #tpu.pipeline_mode<synchronous>, transform_indices = @transform_1, window_bounds = array<i64: 256, 128>}, {pipeline_mode = #tpu.pipeline_mode<synchronous>, transform_indices = @transform_2, window_bounds = array<i64: 1, 128>}, {pipeline_mode = #tpu.pipeline_mode<synchronous>, transform_indices = @transform_3, window_bounds = array<i64: 128, 32>}, {pipeline_mode = #tpu.pipeline_mode<synchronous>, transform_indices = @transform_4, window_bounds = array<i64: 1, 32>}, {transform_indices = @transform_5, window_bounds = array<i64: 8, 32>}]} {
    %c0 = arith.constant 0 : index
    %c0_0 = arith.constant 0 : index
    %0 = vector.load %arg1[%c0, %c0_0] : memref<8x256xf32, #tpu.memory_space<vmem>>, vector<8x256xf32>
    %1 = arith.truncf %0 : vector<8x256xf32> to vector<8x256xbf16>
    %c0_1 = arith.constant 0 : index
    %c0_2 = arith.constant 0 : index
    %2 = vector.load %arg2[%c0_1, %c0_2] : memref<256x128xbf16, #tpu.memory_space<vmem>>, vector<256x128xbf16>
    %cst = arith.constant dense<0.000000e+00> : vector<8x128xf32>
    %3 = tpu.matmul %1, %2, %cst {dimension_numbers = #tpu.dot_dimension_numbers<[1], [0], [0], [1], [0, 0, 1, 1], [], []>} : vector<8x256xbf16>, vector<256x128xbf16>, vector<8x128xf32> -> vector<8x128xf32>
    %c0_3 = arith.constant 0 : index
    %c0_4 = arith.constant 0 : index
    %4 = vector.load %arg3[%c0_3, %c0_4] : memref<1x128xf32, #tpu.memory_space<vmem>>, vector<1x128xf32>
    %5 = vector.broadcast %4 : vector<1x128xf32> to vector<8x128xf32>
    %6 = arith.addf %3, %5 : vector<8x128xf32>
    %cst_5 = arith.constant 0.000000e+00 : f32
    %7 = vector.broadcast %cst_5 : f32 to vector<8x128xf32>
    %8 = arith.maximumf %6, %7 : vector<8x128xf32>
    %9 = arith.truncf %8 : vector<8x128xf32> to vector<8x128xbf16>
    %c0_6 = arith.constant 0 : index
    %c0_7 = arith.constant 0 : index
    %10 = vector.load %arg4[%c0_6, %c0_7] : memref<128x32xbf16, #tpu.memory_space<vmem>>, vector<128x32xbf16>
    %cst_8 = arith.constant dense<0.000000e+00> : vector<8x32xf32>
    %11 = tpu.matmul %9, %10, %cst_8 {dimension_numbers = #tpu.dot_dimension_numbers<[1], [0], [0], [1], [0, 0, 1, 1], [], []>} : vector<8x128xbf16>, vector<128x32xbf16>, vector<8x32xf32> -> vector<8x32xf32>
    %c0_9 = arith.constant 0 : index
    %c0_10 = arith.constant 0 : index
    %12 = vector.load %arg5[%c0_9, %c0_10] : memref<1x32xf32, #tpu.memory_space<vmem>>, vector<1x32xf32>
    %13 = vector.broadcast %12 : vector<1x32xf32> to vector<8x32xf32>
    %14 = arith.addf %11, %13 : vector<8x32xf32>
    %15 = tpu.iota {dimensions = array<i32: 1>} : vector<1x32xi32>
    %c0_i32 = arith.constant 0 : i32
    %16 = vector.broadcast %c0_i32 : i32 to vector<1x32xi32>
    %17 = arith.cmpi sge, %15, %16 : vector<1x32xi32>
    %c4_i32 = arith.constant 4 : i32
    %18 = vector.broadcast %c4_i32 : i32 to vector<1x32xi32>
    %19 = arith.cmpi slt, %15, %18 : vector<1x32xi32>
    %20 = arith.andi %17, %19 : vector<1x32xi1>
    %c4_i32_11 = arith.constant 4 : i32
    %21 = vector.broadcast %c4_i32_11 : i32 to vector<1x32xi32>
    %22 = arith.cmpi sge, %15, %21 : vector<1x32xi32>
    %c8_i32 = arith.constant 8 : i32
    %23 = vector.broadcast %c8_i32 : i32 to vector<1x32xi32>
    %24 = arith.cmpi slt, %15, %23 : vector<1x32xi32>
    %25 = arith.andi %22, %24 : vector<1x32xi1>
    %c8_i32_12 = arith.constant 8 : i32
    %26 = vector.broadcast %c8_i32_12 : i32 to vector<1x32xi32>
    %27 = arith.cmpi sge, %15, %26 : vector<1x32xi32>
    %c12_i32 = arith.constant 12 : i32
    %28 = vector.broadcast %c12_i32 : i32 to vector<1x32xi32>
    %29 = arith.cmpi slt, %15, %28 : vector<1x32xi32>
    %30 = arith.andi %27, %29 : vector<1x32xi1>
    %c12_i32_13 = arith.constant 12 : i32
    %31 = vector.broadcast %c12_i32_13 : i32 to vector<1x32xi32>
    %32 = arith.cmpi sge, %15, %31 : vector<1x32xi32>
    %c14_i32 = arith.constant 14 : i32
    %33 = vector.broadcast %c14_i32 : i32 to vector<1x32xi32>
    %34 = arith.cmpi slt, %15, %33 : vector<1x32xi32>
    %35 = arith.andi %32, %34 : vector<1x32xi1>
    %c14_i32_14 = arith.constant 14 : i32
    %36 = vector.broadcast %c14_i32_14 : i32 to vector<1x32xi32>
    %37 = arith.cmpi sge, %15, %36 : vector<1x32xi32>
    %c16_i32 = arith.constant 16 : i32
    %38 = vector.broadcast %c16_i32 : i32 to vector<1x32xi32>
    %39 = arith.cmpi slt, %15, %38 : vector<1x32xi32>
    %40 = arith.andi %37, %39 : vector<1x32xi1>
    %c16_i32_15 = arith.constant 16 : i32
    %41 = vector.broadcast %c16_i32_15 : i32 to vector<1x32xi32>
    %42 = arith.cmpi sge, %15, %41 : vector<1x32xi32>
    %c18_i32 = arith.constant 18 : i32
    %43 = vector.broadcast %c18_i32 : i32 to vector<1x32xi32>
    %44 = arith.cmpi slt, %15, %43 : vector<1x32xi32>
    %45 = arith.andi %42, %44 : vector<1x32xi1>
    %c18_i32_16 = arith.constant 18 : i32
    %46 = vector.broadcast %c18_i32_16 : i32 to vector<1x32xi32>
    %47 = arith.cmpi sge, %15, %46 : vector<1x32xi32>
    %c21_i32 = arith.constant 21 : i32
    %48 = vector.broadcast %c21_i32 : i32 to vector<1x32xi32>
    %49 = arith.cmpi slt, %15, %48 : vector<1x32xi32>
    %50 = arith.andi %47, %49 : vector<1x32xi1>
    %51 = arith.extui %20 : vector<1x32xi1> to vector<1x32xi32>
    %52 = arith.sitofp %51 : vector<1x32xi32> to vector<1x32xf32>
    %53 = arith.extui %25 : vector<1x32xi1> to vector<1x32xi32>
    %54 = arith.sitofp %53 : vector<1x32xi32> to vector<1x32xf32>
    %55 = arith.extui %30 : vector<1x32xi1> to vector<1x32xi32>
    %56 = arith.sitofp %55 : vector<1x32xi32> to vector<1x32xf32>
    %57 = arith.extui %35 : vector<1x32xi1> to vector<1x32xi32>
    %58 = arith.sitofp %57 : vector<1x32xi32> to vector<1x32xf32>
    %59 = arith.extui %40 : vector<1x32xi1> to vector<1x32xi32>
    %60 = arith.sitofp %59 : vector<1x32xi32> to vector<1x32xf32>
    %61 = arith.extui %45 : vector<1x32xi1> to vector<1x32xi32>
    %62 = arith.sitofp %61 : vector<1x32xi32> to vector<1x32xf32>
    %63 = arith.extui %50 : vector<1x32xi1> to vector<1x32xi32>
    %64 = arith.sitofp %63 : vector<1x32xi32> to vector<1x32xf32>
    %cst_17 = arith.constant 0.000000e+00 : f32
    %65 = vector.broadcast %cst_17 : f32 to vector<8x32xf32>
    %cst_18 = arith.constant 0xFF800000 : f32
    %66 = vector.shape_cast %20 : vector<1x32xi1> to vector<1x32xi1>
    %67 = vector.broadcast %66 : vector<1x32xi1> to vector<8x32xi1>
    %68 = vector.broadcast %cst_18 : f32 to vector<8x32xf32>
    %69 = arith.select %67, %14, %68 : vector<8x32xi1>, vector<8x32xf32>
    %cst_19 = arith.constant dense<0xFF800000> : vector<8xf32>
    %70 = vector.multi_reduction <maximumf>, %69, %cst_19 [1] : vector<8x32xf32> to vector<8xf32>
    %71 = vector.shape_cast %70 : vector<8xf32> to vector<8x1xf32>
    %72 = vector.broadcast %71 : vector<8x1xf32> to vector<8x32xf32>
    %73 = vector.broadcast %52 : vector<1x32xf32> to vector<8x32xf32>
    %74 = arith.mulf %72, %73 : vector<8x32xf32>
    %75 = arith.addf %65, %74 : vector<8x32xf32>
    %cst_20 = arith.constant 0xFF800000 : f32
    %76 = vector.shape_cast %25 : vector<1x32xi1> to vector<1x32xi1>
    %77 = vector.broadcast %76 : vector<1x32xi1> to vector<8x32xi1>
    %78 = vector.broadcast %cst_20 : f32 to vector<8x32xf32>
    %79 = arith.select %77, %14, %78 : vector<8x32xi1>, vector<8x32xf32>
    %cst_21 = arith.constant dense<0xFF800000> : vector<8xf32>
    %80 = vector.multi_reduction <maximumf>, %79, %cst_21 [1] : vector<8x32xf32> to vector<8xf32>
    %81 = vector.shape_cast %80 : vector<8xf32> to vector<8x1xf32>
    %82 = vector.broadcast %81 : vector<8x1xf32> to vector<8x32xf32>
    %83 = vector.broadcast %54 : vector<1x32xf32> to vector<8x32xf32>
    %84 = arith.mulf %82, %83 : vector<8x32xf32>
    %85 = arith.addf %75, %84 : vector<8x32xf32>
    %cst_22 = arith.constant 0xFF800000 : f32
    %86 = vector.shape_cast %30 : vector<1x32xi1> to vector<1x32xi1>
    %87 = vector.broadcast %86 : vector<1x32xi1> to vector<8x32xi1>
    %88 = vector.broadcast %cst_22 : f32 to vector<8x32xf32>
    %89 = arith.select %87, %14, %88 : vector<8x32xi1>, vector<8x32xf32>
    %cst_23 = arith.constant dense<0xFF800000> : vector<8xf32>
    %90 = vector.multi_reduction <maximumf>, %89, %cst_23 [1] : vector<8x32xf32> to vector<8xf32>
    %91 = vector.shape_cast %90 : vector<8xf32> to vector<8x1xf32>
    %92 = vector.broadcast %91 : vector<8x1xf32> to vector<8x32xf32>
    %93 = vector.broadcast %56 : vector<1x32xf32> to vector<8x32xf32>
    %94 = arith.mulf %92, %93 : vector<8x32xf32>
    %95 = arith.addf %85, %94 : vector<8x32xf32>
    %cst_24 = arith.constant 0xFF800000 : f32
    %96 = vector.shape_cast %35 : vector<1x32xi1> to vector<1x32xi1>
    %97 = vector.broadcast %96 : vector<1x32xi1> to vector<8x32xi1>
    %98 = vector.broadcast %cst_24 : f32 to vector<8x32xf32>
    %99 = arith.select %97, %14, %98 : vector<8x32xi1>, vector<8x32xf32>
    %cst_25 = arith.constant dense<0xFF800000> : vector<8xf32>
    %100 = vector.multi_reduction <maximumf>, %99, %cst_25 [1] : vector<8x32xf32> to vector<8xf32>
    %101 = vector.shape_cast %100 : vector<8xf32> to vector<8x1xf32>
    %102 = vector.broadcast %101 : vector<8x1xf32> to vector<8x32xf32>
    %103 = vector.broadcast %58 : vector<1x32xf32> to vector<8x32xf32>
    %104 = arith.mulf %102, %103 : vector<8x32xf32>
    %105 = arith.addf %95, %104 : vector<8x32xf32>
    %cst_26 = arith.constant 0xFF800000 : f32
    %106 = vector.shape_cast %40 : vector<1x32xi1> to vector<1x32xi1>
    %107 = vector.broadcast %106 : vector<1x32xi1> to vector<8x32xi1>
    %108 = vector.broadcast %cst_26 : f32 to vector<8x32xf32>
    %109 = arith.select %107, %14, %108 : vector<8x32xi1>, vector<8x32xf32>
    %cst_27 = arith.constant dense<0xFF800000> : vector<8xf32>
    %110 = vector.multi_reduction <maximumf>, %109, %cst_27 [1] : vector<8x32xf32> to vector<8xf32>
    %111 = vector.shape_cast %110 : vector<8xf32> to vector<8x1xf32>
    %112 = vector.broadcast %111 : vector<8x1xf32> to vector<8x32xf32>
    %113 = vector.broadcast %60 : vector<1x32xf32> to vector<8x32xf32>
    %114 = arith.mulf %112, %113 : vector<8x32xf32>
    %115 = arith.addf %105, %114 : vector<8x32xf32>
    %cst_28 = arith.constant 0xFF800000 : f32
    %116 = vector.shape_cast %45 : vector<1x32xi1> to vector<1x32xi1>
    %117 = vector.broadcast %116 : vector<1x32xi1> to vector<8x32xi1>
    %118 = vector.broadcast %cst_28 : f32 to vector<8x32xf32>
    %119 = arith.select %117, %14, %118 : vector<8x32xi1>, vector<8x32xf32>
    %cst_29 = arith.constant dense<0xFF800000> : vector<8xf32>
    %120 = vector.multi_reduction <maximumf>, %119, %cst_29 [1] : vector<8x32xf32> to vector<8xf32>
    %121 = vector.shape_cast %120 : vector<8xf32> to vector<8x1xf32>
    %122 = vector.broadcast %121 : vector<8x1xf32> to vector<8x32xf32>
    %123 = vector.broadcast %62 : vector<1x32xf32> to vector<8x32xf32>
    %124 = arith.mulf %122, %123 : vector<8x32xf32>
    %125 = arith.addf %115, %124 : vector<8x32xf32>
    %cst_30 = arith.constant 0xFF800000 : f32
    %126 = vector.shape_cast %50 : vector<1x32xi1> to vector<1x32xi1>
    %127 = vector.broadcast %126 : vector<1x32xi1> to vector<8x32xi1>
    %128 = vector.broadcast %cst_30 : f32 to vector<8x32xf32>
    %129 = arith.select %127, %14, %128 : vector<8x32xi1>, vector<8x32xf32>
    %cst_31 = arith.constant dense<0xFF800000> : vector<8xf32>
    %130 = vector.multi_reduction <maximumf>, %129, %cst_31 [1] : vector<8x32xf32> to vector<8xf32>
    %131 = vector.shape_cast %130 : vector<8xf32> to vector<8x1xf32>
    %132 = vector.broadcast %131 : vector<8x1xf32> to vector<8x32xf32>
    %133 = vector.broadcast %64 : vector<1x32xf32> to vector<8x32xf32>
    %134 = arith.mulf %132, %133 : vector<8x32xf32>
    %135 = arith.addf %125, %134 : vector<8x32xf32>
    %136 = arith.subf %14, %135 : vector<8x32xf32>
    %137 = math.exp %136 : vector<8x32xf32>
    %cst_32 = arith.constant 0.000000e+00 : f32
    %138 = vector.broadcast %cst_32 : f32 to vector<8x32xf32>
    %139 = vector.broadcast %52 : vector<1x32xf32> to vector<8x32xf32>
    %140 = arith.mulf %137, %139 : vector<8x32xf32>
    %cst_33 = arith.constant dense<0.000000e+00> : vector<8xf32>
    %141 = vector.multi_reduction <add>, %140, %cst_33 [1] : vector<8x32xf32> to vector<8xf32>
    %142 = vector.shape_cast %141 : vector<8xf32> to vector<8x1xf32>
    %143 = math.log %142 : vector<8x1xf32>
    %144 = vector.broadcast %143 : vector<8x1xf32> to vector<8x32xf32>
    %145 = vector.broadcast %52 : vector<1x32xf32> to vector<8x32xf32>
    %146 = arith.mulf %144, %145 : vector<8x32xf32>
    %147 = arith.addf %138, %146 : vector<8x32xf32>
    %148 = vector.broadcast %54 : vector<1x32xf32> to vector<8x32xf32>
    %149 = arith.mulf %137, %148 : vector<8x32xf32>
    %cst_34 = arith.constant dense<0.000000e+00> : vector<8xf32>
    %150 = vector.multi_reduction <add>, %149, %cst_34 [1] : vector<8x32xf32> to vector<8xf32>
    %151 = vector.shape_cast %150 : vector<8xf32> to vector<8x1xf32>
    %152 = math.log %151 : vector<8x1xf32>
    %153 = vector.broadcast %152 : vector<8x1xf32> to vector<8x32xf32>
    %154 = vector.broadcast %54 : vector<1x32xf32> to vector<8x32xf32>
    %155 = arith.mulf %153, %154 : vector<8x32xf32>
    %156 = arith.addf %147, %155 : vector<8x32xf32>
    %157 = vector.broadcast %56 : vector<1x32xf32> to vector<8x32xf32>
    %158 = arith.mulf %137, %157 : vector<8x32xf32>
    %cst_35 = arith.constant dense<0.000000e+00> : vector<8xf32>
    %159 = vector.multi_reduction <add>, %158, %cst_35 [1] : vector<8x32xf32> to vector<8xf32>
    %160 = vector.shape_cast %159 : vector<8xf32> to vector<8x1xf32>
    %161 = math.log %160 : vector<8x1xf32>
    %162 = vector.broadcast %161 : vector<8x1xf32> to vector<8x32xf32>
    %163 = vector.broadcast %56 : vector<1x32xf32> to vector<8x32xf32>
    %164 = arith.mulf %162, %163 : vector<8x32xf32>
    %165 = arith.addf %156, %164 : vector<8x32xf32>
    %166 = vector.broadcast %58 : vector<1x32xf32> to vector<8x32xf32>
    %167 = arith.mulf %137, %166 : vector<8x32xf32>
    %cst_36 = arith.constant dense<0.000000e+00> : vector<8xf32>
    %168 = vector.multi_reduction <add>, %167, %cst_36 [1] : vector<8x32xf32> to vector<8xf32>
    %169 = vector.shape_cast %168 : vector<8xf32> to vector<8x1xf32>
    %170 = math.log %169 : vector<8x1xf32>
    %171 = vector.broadcast %170 : vector<8x1xf32> to vector<8x32xf32>
    %172 = vector.broadcast %58 : vector<1x32xf32> to vector<8x32xf32>
    %173 = arith.mulf %171, %172 : vector<8x32xf32>
    %174 = arith.addf %165, %173 : vector<8x32xf32>
    %175 = vector.broadcast %60 : vector<1x32xf32> to vector<8x32xf32>
    %176 = arith.mulf %137, %175 : vector<8x32xf32>
    %cst_37 = arith.constant dense<0.000000e+00> : vector<8xf32>
    %177 = vector.multi_reduction <add>, %176, %cst_37 [1] : vector<8x32xf32> to vector<8xf32>
    %178 = vector.shape_cast %177 : vector<8xf32> to vector<8x1xf32>
    %179 = math.log %178 : vector<8x1xf32>
    %180 = vector.broadcast %179 : vector<8x1xf32> to vector<8x32xf32>
    %181 = vector.broadcast %60 : vector<1x32xf32> to vector<8x32xf32>
    %182 = arith.mulf %180, %181 : vector<8x32xf32>
    %183 = arith.addf %174, %182 : vector<8x32xf32>
    %184 = vector.broadcast %62 : vector<1x32xf32> to vector<8x32xf32>
    %185 = arith.mulf %137, %184 : vector<8x32xf32>
    %cst_38 = arith.constant dense<0.000000e+00> : vector<8xf32>
    %186 = vector.multi_reduction <add>, %185, %cst_38 [1] : vector<8x32xf32> to vector<8xf32>
    %187 = vector.shape_cast %186 : vector<8xf32> to vector<8x1xf32>
    %188 = math.log %187 : vector<8x1xf32>
    %189 = vector.broadcast %188 : vector<8x1xf32> to vector<8x32xf32>
    %190 = vector.broadcast %62 : vector<1x32xf32> to vector<8x32xf32>
    %191 = arith.mulf %189, %190 : vector<8x32xf32>
    %192 = arith.addf %183, %191 : vector<8x32xf32>
    %193 = vector.broadcast %64 : vector<1x32xf32> to vector<8x32xf32>
    %194 = arith.mulf %137, %193 : vector<8x32xf32>
    %cst_39 = arith.constant dense<0.000000e+00> : vector<8xf32>
    %195 = vector.multi_reduction <add>, %194, %cst_39 [1] : vector<8x32xf32> to vector<8xf32>
    %196 = vector.shape_cast %195 : vector<8xf32> to vector<8x1xf32>
    %197 = math.log %196 : vector<8x1xf32>
    %198 = vector.broadcast %197 : vector<8x1xf32> to vector<8x32xf32>
    %199 = vector.broadcast %64 : vector<1x32xf32> to vector<8x32xf32>
    %200 = arith.mulf %198, %199 : vector<8x32xf32>
    %201 = arith.addf %192, %200 : vector<8x32xf32>
    %202 = arith.subf %136, %201 : vector<8x32xf32>
    %c0_40 = arith.constant 0 : index
    %c0_41 = arith.constant 0 : index
    %203 = vector.load %arg6[%c0_40, %c0_41] : memref<8x32xf32, #tpu.memory_space<vmem>>, vector<8x32xf32>
    tpu.vector_store %arg6[%c0_40, %c0_41], %202 {strides = array<i32>} : memref<8x32xf32, #tpu.memory_space<vmem>>, vector<8x32xf32>,
    return
  }
  func.func @transform_0(%arg0: i32) -> (i32, i32) {
    %c0_i32 = arith.constant 0 : i32
    %c0_i32_0 = arith.constant 0 : i32
    return %arg0, %c0_i32 : i32, i32
  }
  func.func @transform_1(%arg0: i32) -> (i32, i32) {
    %c0_i32 = arith.constant 0 : i32
    %c0_i32_0 = arith.constant 0 : i32
    %c0_i32_1 = arith.constant 0 : i32
    return %c0_i32, %c0_i32_0 : i32, i32
  }
  func.func @transform_2(%arg0: i32) -> (i32, i32) {
    %c0_i32 = arith.constant 0 : i32
    %c0_i32_0 = arith.constant 0 : i32
    %c0_i32_1 = arith.constant 0 : i32
    return %c0_i32, %c0_i32_0 : i32, i32
  }
  func.func @transform_3(%arg0: i32) -> (i32, i32) {
    %c0_i32 = arith.constant 0 : i32
    %c0_i32_0 = arith.constant 0 : i32
    %c0_i32_1 = arith.constant 0 : i32
    return %c0_i32, %c0_i32_0 : i32, i32
  }
  func.func @transform_4(%arg0: i32) -> (i32, i32) {
    %c0_i32 = arith.constant 0 : i32
    %c0_i32_0 = arith.constant 0 : i32
    %c0_i32_1 = arith.constant 0 : i32
    return %c0_i32, %c0_i32_0 : i32, i32
  }
  func.func @transform_5(%arg0: i32) -> (i32, i32) {
    %c0_i32 = arith.constant 0 : i32
    %c0_i32_0 = arith.constant 0 : i32
    return %arg0, %c0_i32 : i32, i32
  }
}

</mosaic_0001>

<llo_original>
// kernel: _forward_b_core.1
$region0: #{_forward_b_core.1}
  #allocation0 [shape = 'u32[]', space=smem, size = 0x4, offset = 0x4, fixed_abs, tag = 'smem constant byte address 0x4 - core index']
  #allocation1 [shape = 'u32[72,128]{1,0:T(1,128)}', space=vmem, size = 0x9000, scoped, tag = 'internal scratch']
  %s0 = inlined_call_operand.vmem [shape: f32[16,256], index: 0, kind: input, shape index: {}]
  %s1 = inlined_call_operand.vmem [shape: bf16[256,128], index: 1, kind: input, shape index: {}]
  %s2 = inlined_call_operand.vmem [shape: f32[1,128], index: 2, kind: input, shape index: {}]
  %s3 = inlined_call_operand.vmem [shape: bf16[128,32], index: 3, kind: input, shape index: {}]
  %s4 = inlined_call_operand.vmem [shape: f32[1,32], index: 4, kind: input, shape index: {}]
  %s5 = inlined_call_operand.vmem [shape: f32[16,32], index: 5, kind: output, shape index: {}]
  %s6 = sld [smem:[#allocation0]]
  $region53: #{_forward_b_core.1} parent=0
    _
  %s8 = ssub.s32 1, %s6
  %s9 = scalar_select 0, %s8, %s6
  loop: start=0, step=1, limit=4
  $region2: #{_forward_b_core.1} parent=0 // loop_pre_header
    _
  $region3: #{_forward_b_core.1} parent=0 // loop_header
    %s11 = sphi 0, %s15
    %p12 = scmp.ge.s32.totalorder %s11, 4
    %s21 = sphi 0, %s23
    %s24 = sphi 0, %s21
    %s25 = sphi 0, %s24
    %s41 = sphi 0, %s25
    %s45 = sphi 0, %s45
    %s47 = sphi 0, %s45
    %s48 = sphi 0, %s47
    %s62 = sphi 0, %s48
    %s66 = sphi 0, %s66
    %s68 = sphi 0, %s66
    %s69 = sphi 0, %s68
    %s83 = sphi 0, %s69
    %s87 = sphi 0, %s87
    %s89 = sphi 0, %s87
    %s90 = sphi 0, %s89
    %s104 = sphi 0, %s90
    %s108 = sphi 0, %s108
    %s110 = sphi 0, %s108
    %s111 = sphi 0, %s110
    %s125 = sphi 0, %s111
    %s131 = sphi 0, %s133
    %s134 = sphi 0, %s131
    %s135 = sphi 0, %s134
    %s151 = sphi 0, %s135
  $region4: #{_forward_b_core.1} parent=0 // loop_header_branch
    %14 = sbr.rel (%p12) target = $region8
  $region5: #{_forward_b_core.1} parent=0 // loop_body
    %s16 = ssub.s32 %s11, 1
    %s17 = ssub.s32 %s11, 2
    %s18 = sadd.s32 %s11, 1
    %s19 = ssub.s32 %s11, %s18
    %p20 = scmp.eq.s32.totalorder %s19, 0
    %s22 = sadd.s32 %s21, 1
    %s23 = scalar_select %p20, %s21, %s22
    %p26 = pneg %p20
    %p27 = scmp.eq.s32.totalorder %s11, 1
    %p28 = por %p26, %p27
    %p29 = scmp.ne.s32.totalorder %s21, %s24
    %p30 = scmp.eq.s32.totalorder %s11, 0
    %p31 = por %p29, %p30
    %p32 = scmp.ne.s32.totalorder %s21, %s24
    %p33 = scmp.eq.s32.totalorder %s16, 1
    %p34 = por %p32, %p33
    %p35 = scmp.ne.s32.totalorder %s24, %s25
    %p36 = scmp.eq.s32.totalorder %s16, 0
    %p37 = por %p35, %p36
    %p38 = scmp.ne.s32.totalorder %s24, %s25
    %p39 = scmp.eq.s32.totalorder %s17, 1
    %p40 = por %p38, %p39
    %p42 = scmp.ne.s32.totalorder %s25, %s41
    %p43 = scmp.eq.s32.totalorder %s17, 0
    %p44 = por %p42, %p43
    %s46 = sadd.s32 %s45, 1
    %p49 = scmp.eq.s32.totalorder %s11, 1
    %p50 = scmp.ne.s32.totalorder %s45, %s47
    %p51 = scmp.eq.s32.totalorder %s11, 0
    %p52 = por %p50, %p51
    %p53 = scmp.ne.s32.totalorder %s45, %s47
    %p54 = scmp.eq.s32.totalorder %s16, 1
    %p55 = por %p53, %p54
    %p56 = scmp.ne.s32.totalorder %s47, %s48
    %p57 = scmp.eq.s32.totalorder %s16, 0
    %p58 = por %p56, %p57
    %p59 = scmp.ne.s32.totalorder %s47, %s48
    %p60 = scmp.eq.s32.totalorder %s17, 1
    %p61 = por %p59, %p60
    %p63 = scmp.ne.s32.totalorder %s48, %s62
    %p64 = scmp.eq.s32.totalorder %s17, 0
    %p65 = por %p63, %p64
    %s67 = sadd.s32 %s66, 1
    %p70 = scmp.eq.s32.totalorder %s11, 1
    %p71 = scmp.ne.s32.totalorder %s66, %s68
    %p72 = scmp.eq.s32.totalorder %s11, 0
    %p73 = por %p71, %p72
    %p74 = scmp.ne.s32.totalorder %s66, %s68
    %p75 = scmp.eq.s32.totalorder %s16, 1
    %p76 = por %p74, %p75
    %p77 = scmp.ne.s32.totalorder %s68, %s69
    %p78 = scmp.eq.s32.totalorder %s16, 0
    %p79 = por %p77, %p78
    %p80 = scmp.ne.s32.totalorder %s68, %s69
    %p81 = scmp.eq.s32.totalorder %s17, 1
    %p82 = por %p80, %p81
    %p84 = scmp.ne.s32.totalorder %s69, %s83
    %p85 = scmp.eq.s32.totalorder %s17, 0
    %p86 = por %p84, %p85
    %s88 = sadd.s32 %s87, 1
    %p91 = scmp.eq.s32.totalorder %s11, 1
    %p92 = scmp.ne.s32.totalorder %s87, %s89
    %p93 = scmp.eq.s32.totalorder %s11, 0
    %p94 = por %p92, %p93
    %p95 = scmp.ne.s32.totalorder %s87, %s89
    %p96 = scmp.eq.s32.totalorder %s16, 1
    %p97 = por %p95, %p96
    %p98 = scmp.ne.s32.totalorder %s89, %s90
    %p99 = scmp.eq.s32.totalorder %s16, 0
    %p100 = por %p98, %p99
    %p101 = scmp.ne.s32.totalorder %s89, %s90
    %p102 = scmp.eq.s32.totalorder %s17, 1
    %p103 = por %p101, %p102
    %p105 = scmp.ne.s32.totalorder %s90, %s104
    %p106 = scmp.eq.s32.totalorder %s17, 0
    %p107 = por %p105, %p106
    %s109 = sadd.s32 %s108, 1
    %p112 = scmp.eq.s32.totalorder %s11, 1
    %p113 = scmp.ne.s32.totalorder %s108, %s110
    %p114 = scmp.eq.s32.totalorder %s11, 0
    %p115 = por %p113, %p114
    %p116 = scmp.ne.s32.totalorder %s108, %s110
    %p117 = scmp.eq.s32.totalorder %s16, 1
    %p118 = por %p116, %p117
    %p119 = scmp.ne.s32.totalorder %s110, %s111
    %p120 = scmp.eq.s32.totalorder %s16, 0
    %p121 = por %p119, %p120
    %p122 = scmp.ne.s32.totalorder %s110, %s111
    %p123 = scmp.eq.s32.totalorder %s17, 1
    %p124 = por %p122, %p123
    %p126 = scmp.ne.s32.totalorder %s111, %s125
    %p127 = scmp.eq.s32.totalorder %s17, 0
    %p128 = por %p126, %p127
    %s129 = ssub.s32 %s11, %s18
    %p130 = scmp.eq.s32.totalorder %s129, 0
    %s132 = sadd.s32 %s131, 1
    %s133 = scalar_select %p130, %s131, %s132
    %p136 = pneg %p130
    %p137 = scmp.eq.s32.totalorder %s11, 1
    %p138 = por %p136, %p137
    %p139 = scmp.ne.s32.totalorder %s131, %s134
    %p140 = scmp.eq.s32.totalorder %s11, 0
    %p141 = por %p139, %p140
    %p142 = scmp.ne.s32.totalorder %s131, %s134
    %p143 = scmp.eq.s32.totalorder %s16, 1
    %p144 = por %p142, %p143
    %p145 = scmp.ne.s32.totalorder %s134, %s135
    %p146 = scmp.eq.s32.totalorder %s16, 0
    %p147 = por %p145, %p146
    %p148 = scmp.ne.s32.totalorder %s134, %s135
    %p149 = scmp.eq.s32.totalorder %s17, 1
    %p150 = por %p148, %p149
    %p152 = scmp.ne.s32.totalorder %s135, %s151
    %p153 = scmp.eq.s32.totalorder %s17, 0
    %p154 = por %p152, %p153
    %p155 = scmp.le.s32.totalorder 1, %s11
    %p156 = scmp.lt.s32.totalorder %s11, 3
    %p157 = pnand %p155, %p156
    %p158 = pneg %p157
    // Predicated region
    $region9: #{_forward_b_core.1} parent=5 // pred_check
      _
    $region10: #{_forward_b_core.1} parent=5 // pred_check_branch
      %160 = sbr.rel (%p157) target = $region12
    $region11: #{_forward_b_core.1} parent=5 // pred_region
      %s161 = ssub.s32 %s11, 1
      // Predicated region
      $region13: #{_forward_b_core.1} parent=11 // pred_check
        %p162 = pneg %p58
      $region14: #{_forward_b_core.1} parent=11 // pred_check_branch
        %164 = sbr.rel (%p162) target = $region16
      $region15: #{_forward_b_core.1} parent=11 // pred_region
        _
      $region16: #{_forward_b_core.1} parent=11 // pred_fallthru
        _
      // Predicated region
      $region17: #{_forward_b_core.1} parent=11 // pred_check
        %p165 = pneg %p79
      $region18: #{_forward_b_core.1} parent=11 // pred_check_branch
        %167 = sbr.rel (%p165) target = $region20
      $region19: #{_forward_b_core.1} parent=11 // pred_region
        _
      $region20: #{_forward_b_core.1} parent=11 // pred_fallthru
        _
      // Predicated region
      $region21: #{_forward_b_core.1} parent=11 // pred_check
        %p168 = pneg %p100
      $region22: #{_forward_b_core.1} parent=11 // pred_check_branch
        %170 = sbr.rel (%p168) target = $region24
      $region23: #{_forward_b_core.1} parent=11 // pred_region
        _
      $region24: #{_forward_b_core.1} parent=11 // pred_fallthru
        _
      // Predicated region
      $region25: #{_forward_b_core.1} parent=11 // pred_check
        %p171 = pneg %p121
      $region26: #{_forward_b_core.1} parent=11 // pred_check_branch
        %173 = sbr.rel (%p171) target = $region28
      $region27: #{_forward_b_core.1} parent=11 // pred_region
        _
      $region28: #{_forward_b_core.1} parent=11 // pred_fallthru
        _
    $region12: #{_forward_b_core.1} parent=5 // pred_fallthru
      _
    %p174 = scmp.lt.s32.totalorder %s11, 2
    // Predicated region
    $region29: #{_forward_b_core.1} parent=5 // pred_check
      %p175 = pneg %p174
    $region30: #{_forward_b_core.1} parent=5 // pred_check_branch
      %177 = sbr.rel (%p175) target = $region32
    $region31: #{_forward_b_core.1} parent=5 // pred_region
      // Predicated region
      $region33: #{_forward_b_core.1} parent=31 // pred_check
        %p178 = pneg %p31
      $region34: #{_forward_b_core.1} parent=31 // pred_check_branch
        %180 = sbr.rel (%p178) target = $region36
      $region35: #{_forward_b_core.1} parent=31 // pred_region
        %p181 = scmp.lt.s32.totalorder %s11, 1
        %s182 = scalar_select %p181, %s11, 1
        %s183 = smul.addr %s182, 2
        %s184 = smul.addr %s183, 8
        %s185 = scalar_lea.vmem %s0, %s184
      $region36: #{_forward_b_core.1} parent=31 // pred_fallthru
        _
    $region32: #{_forward_b_core.1} parent=5 // pred_fallthru
      _
    %p186 = scmp.le.s32.totalorder 1, %s11
    %p187 = scmp.lt.s32.totalorder %s11, 3
    %p188 = pnand %p186, %p187
    %p189 = pneg %p188
    // Predicated region
    $region37: #{_forward_b_core.1} parent=5 // pred_check
      _
    $region38: #{_forward_b_core.1} parent=5 // pred_check_branch
      %191 = sbr.rel (%p188) target = $region40
    $region39: #{_forward_b_core.1} parent=5 // pred_region
      %s192 = ssub.s32 %s11, 1
      %p193 = scmp.lt.s32.totalorder %s16, 1
      %s194 = scalar_select %p193, %s16, 1
      %s195 = smul.addr %s194, 2
      %s196 = smul.addr %s195, 8
      %s197 = scalar_lea.vmem %s0, %s196
      %p198 = pneg %p37
      %p199 = pneg %p34
      %p200 = pneg %p58
      %p201 = pneg %p55
      %p202 = pneg %p79
      %p203 = pneg %p76
      %p204 = pneg %p100
      %p205 = pneg %p97
      %p206 = pneg %p121
      %p207 = pneg %p118
      %p208 = pneg %p147
      %p209 = pneg %p144
      %p210 = scmp.lt.s32.totalorder %s16, 1
      %s211 = scalar_select %p210, %s16, 1
      %s212 = smul.addr %s211, 8
      %s213 = scalar_lea.vmem %s5, %s212
      %p214 = scmp.lt.s32.totalorder %s16, 1
      %s215 = scalar_select %p214, %s16, 1
      %s216 = smul.addr %s215, 2
      %s217 = smul.addr %s216, 8
      %s218 = scalar_lea.vmem %s0, %s217
      %p219 = scmp.lt.s32.totalorder %s16, 1
      %s220 = scalar_select %p219, %s16, 1
      %s221 = smul.addr %s220, 8
      %s222 = scalar_lea.vmem %s5, %s221
      %v223 = vld [vmem:[%s218] sm:$0xff]
      %v224 = vld [vmem:[%s218 + $0x8] sm:$0xff]
      %v225 = vpack.c.bf16 %v223, %v223
      %v226 = vpack.c.bf16 %v224, %v224
      %v227 = vld [vmem:[%s1] sm:$0xf]
      %v228 = vld [vmem:[%s1 + $0x4] sm:$0xf]
      %v229 = vld [vmem:[%s1 + $0x8] sm:$0xf]
      %v230 = vld [vmem:[%s1 + $0xc] sm:$0xf]
      %v231 = vld [vmem:[%s1 + $0x10] sm:$0xf]
      %v232 = vld [vmem:[%s1 + $0x14] sm:$0xf]
      %v233 = vld [vmem:[%s1 + $0x18] sm:$0xf]
      %v234 = vld [vmem:[%s1 + $0x1c] sm:$0xf]
      %v235 = vld [vmem:[%s1 + $0x20] sm:$0xf]
      %v236 = vld [vmem:[%s1 + $0x24] sm:$0xf]
      %v237 = vld [vmem:[%s1 + $0x28] sm:$0xf]
      %v238 = vld [vmem:[%s1 + $0x2c] sm:$0xf]
      %v239 = vld [vmem:[%s1 + $0x30] sm:$0xf]
      %v240 = vld [vmem:[%s1 + $0x34] sm:$0xf]
      %v241 = vld [vmem:[%s1 + $0x38] sm:$0xf]
      %v242 = vld [vmem:[%s1 + $0x3c] sm:$0xf]
      %v243 = vld [vmem:[%s1 + $0x40] sm:$0xf]
      %v244 = vld [vmem:[%s1 + $0x44] sm:$0xf]
      %v245 = vld [vmem:[%s1 + $0x48] sm:$0xf]
      %v246 = vld [vmem:[%s1 + $0x4c] sm:$0xf]
      %v247 = vld [vmem:[%s1 + $0x50] sm:$0xf]
      %v248 = vld [vmem:[%s1 + $0x54] sm:$0xf]
      %v249 = vld [vmem:[%s1 + $0x58] sm:$0xf]
      %v250 = vld [vmem:[%s1 + $0x5c] sm:$0xf]
      %v251 = vld [vmem:[%s1 + $0x60] sm:$0xf]
      %v252 = vld [vmem:[%s1 + $0x64] sm:$0xf]
      %v253 = vld [vmem:[%s1 + $0x68] sm:$0xf]
      %v254 = vld [vmem:[%s1 + $0x6c] sm:$0xf]
      %v255 = vld [vmem:[%s1 + $0x70] sm:$0xf]
      %v256 = vld [vmem:[%s1 + $0x74] sm:$0xf]
      %v257 = vld [vmem:[%s1 + $0x78] sm:$0xf]
      %v258 = vld [vmem:[%s1 + $0x7c] sm:$0xf]
      %v259 = vld [vmem:[%s2] sm:$0x1]
      %v261 = vperm.slane %v259, 0
      %v295 = vunpack.c.l.b16 %v227
      %v296 = vunpack.c.l.b16 %v228
      %v297 = vunpack.c.l.b16 %v229
      %v298 = vunpack.c.l.b16 %v230
      %v299 = vunpack.c.l.b16 %v231
      %v300 = vunpack.c.l.b16 %v232
      %v301 = vunpack.c.l.b16 %v233
      %v302 = vunpack.c.l.b16 %v234
      %v303 = vunpack.c.l.b16 %v235
      %v304 = vunpack.c.l.b16 %v236
      %v305 = vunpack.c.l.b16 %v237
      %v306 = vunpack.c.l.b16 %v238
      %v307 = vunpack.c.l.b16 %v239
      %v308 = vunpack.c.l.b16 %v240
      %v309 = vunpack.c.l.b16 %v241
      %v310 = vunpack.c.l.b16 %v242
      %v311 = vunpack.c.l.b16 %v243
      %v312 = vunpack.c.l.b16 %v244
      %v313 = vunpack.c.l.b16 %v245
      %v314 = vunpack.c.l.b16 %v246
      %v315 = vunpack.c.l.b16 %v247
      %v316 = vunpack.c.l.b16 %v248
      %v317 = vunpack.c.l.b16 %v249
      %v318 = vunpack.c.l.b16 %v250
      %v319 = vunpack.c.l.b16 %v251
      %v320 = vunpack.c.l.b16 %v252
      %v321 = vunpack.c.l.b16 %v253
      %v322 = vunpack.c.l.b16 %v254
      %v323 = vunpack.c.l.b16 %v255
      %v324 = vunpack.c.l.b16 %v256
      %v325 = vunpack.c.l.b16 %v257
      %v326 = vunpack.c.l.b16 %v258
      %v327 = vpack.c.b16 %v296, %v295
      %v328 = vpack.c.b16 %v298, %v297
      %v329 = vpack.c.b16 %v300, %v299
      %v330 = vpack.c.b16 %v302, %v301
      %v331 = vpack.c.b16 %v304, %v303
      %v332 = vpack.c.b16 %v306, %v305
      %v333 = vpack.c.b16 %v308, %v307
      %v334 = vpack.c.b16 %v310, %v309
      %v335 = vpack.c.b16 %v312, %v311
      %v336 = vpack.c.b16 %v314, %v313
      %v337 = vpack.c.b16 %v316, %v315
      %v338 = vpack.c.b16 %v318, %v317
      %v339 = vpack.c.b16 %v320, %v319
      %v340 = vpack.c.b16 %v322, %v321
      %v341 = vpack.c.b16 %v324, %v323
      %v342 = vpack.c.b16 %v326, %v325
      %359 = vmatpush.bf16.msra.mxu0 %v334
      %360 = vmatpush.bf16.msra.mxu0 %v333
      %361 = vmatpush.bf16.msra.mxu0 %v332
      %362 = vmatpush.bf16.msra.mxu0 %v331
      %363 = vmatpush.bf16.msra.mxu0 %v330
      %364 = vmatpush.bf16.msra.mxu0 %v329
      %365 = vmatpush.bf16.msra.mxu0 %v328
      %366 = vmatpush.bf16.msra.mxu0 %v327
      %367 = vmatmul.bf16.gmra.mxu0 %v225
      %v368 = vpop.f32.mrf.mxu0
      %v369 = vadd.f32 %v261, %v368
      %v370 = vpop.f32.mrf.mxu0
      %371 = vdwg.mxu0
      %372 = vmatpush.bf16.msra.mxu0 %v342
      %373 = vmatpush.bf16.msra.mxu0 %v341
      %374 = vmatpush.bf16.msra.mxu0 %v340
      %375 = vmatpush.bf16.msra.mxu0 %v339
      %376 = vmatpush.bf16.msra.mxu0 %v338
      %377 = vmatpush.bf16.msra.mxu0 %v337
      %378 = vmatpush.bf16.msra.mxu0 %v336
      %379 = vmatpush.bf16.msra.mxu0 %v335
      %380 = vmatmul.bf16.gmra.mxu0 %v226
      %v381 = vpop.f32.mrf.mxu0
      %v382 = vadd.f32 %v369, %v381
      %v383 = vpop.f32.mrf.mxu0
      %384 = vdwg.mxu0
      %v385 = vmax.f32 %v382, 0.0
      %v386 = vpack.c.bf16 %v385, %v385
      %v387 = vld [vmem:[%s3] sm:$0xf]
      %v388 = vld [vmem:[%s3 + $0x4] sm:$0xf]
      %v389 = vld [vmem:[%s3 + $0x8] sm:$0xf]
      %v390 = vld [vmem:[%s3 + $0xc] sm:$0xf]
      %v391 = vld [vmem:[%s3 + $0x10] sm:$0xf]
      %v392 = vld [vmem:[%s3 + $0x14] sm:$0xf]
      %v393 = vld [vmem:[%s3 + $0x18] sm:$0xf]
      %v394 = vld [vmem:[%s3 + $0x1c] sm:$0xf]
      %v395 = vld [vmem:[%s3 + $0x20] sm:$0xf]
      %v396 = vld [vmem:[%s3 + $0x24] sm:$0xf]
      %v397 = vld [vmem:[%s3 + $0x28] sm:$0xf]
      %v398 = vld [vmem:[%s3 + $0x2c] sm:$0xf]
      %v399 = vld [vmem:[%s3 + $0x30] sm:$0xf]
      %v400 = vld [vmem:[%s3 + $0x34] sm:$0xf]
      %v401 = vld [vmem:[%s3 + $0x38] sm:$0xf]
      %v402 = vld [vmem:[%s3 + $0x3c] sm:$0xf]
      %v403 = vld [vmem:[%s4] sm:$0x1]
      %v405 = vperm.slane %v403, 0
      %v423 = vunpack.c.l.b16 %v387
      %v424 = vunpack.c.l.b16 %v388
      %v425 = vunpack.c.l.b16 %v389
      %v426 = vunpack.c.l.b16 %v390
      %v427 = vunpack.c.l.b16 %v391
      %v428 = vunpack.c.l.b16 %v392
      %v429 = vunpack.c.l.b16 %v393
      %v430 = vunpack.c.l.b16 %v394
      %v431 = vunpack.c.l.b16 %v395
      %v432 = vunpack.c.l.b16 %v396
      %v433 = vunpack.c.l.b16 %v397
      %v434 = vunpack.c.l.b16 %v398
      %v435 = vunpack.c.l.b16 %v399
      %v436 = vunpack.c.l.b16 %v400
      %v437 = vunpack.c.l.b16 %v401
      %v438 = vunpack.c.l.b16 %v402
      %v439 = vpack.c.b16 %v424, %v423
      %v440 = vpack.c.b16 %v426, %v425
      %v441 = vpack.c.b16 %v428, %v427
      %v442 = vpack.c.b16 %v430, %v429
      %v443 = vpack.c.b16 %v432, %v431
      %v444 = vpack.c.b16 %v434, %v433
      %v445 = vpack.c.b16 %v436, %v435
      %v446 = vpack.c.b16 %v438, %v437
      %455 = vmatpush.bf16.msra.mxu0 %v446
      %456 = vmatpush.bf16.msra.mxu0 %v445
      %457 = vmatpush.bf16.msra.mxu0 %v444
      %458 = vmatpush.bf16.msra.mxu0 %v443
      %459 = vmatpush.bf16.msra.mxu0 %v442
      %460 = vmatpush.bf16.msra.mxu0 %v441
      %461 = vmatpush.bf16.msra.mxu0 %v440
      %462 = vmatpush.bf16.msra.mxu0 %v439
      %463 = vmatmul.bf16.gmra.mxu0 %v386
      %v464 = vpop.f32.mrf.mxu0
      %v465 = vadd.f32 %v405, %v464
      %v466 = vpop.f32.mrf.mxu0
      %467 = vdwg.mxu0
      %v468 = vlaneseq
      %v469 = vand.u32 %v468, 127
      %vm470 = vcmp.ge.s32.totalorder %v469, 0
      %vm471 = vcmp.lt.s32.totalorder %v469, 4
      %vm472 = vmand %vm470, %vm471
      %vm473 = vcmp.ge.s32.totalorder %v469, 4
      %vm474 = vcmp.lt.s32.totalorder %v469, 8
      %vm475 = vmand %vm473, %vm474
      %vm476 = vcmp.ge.s32.totalorder %v469, 8
      %vm477 = vcmp.lt.s32.totalorder %v469, 12
      %vm478 = vmand %vm476, %vm477
      %vm479 = vcmp.ge.s32.totalorder %v469, 12
      %vm480 = vcmp.lt.s32.totalorder %v469, 14
      %vm481 = vmand %vm479, %vm480
      %vm482 = vcmp.ge.s32.totalorder %v469, 14
      %vm483 = vcmp.lt.s32.totalorder %v469, 16
      %vm484 = vmand %vm482, %vm483
      %vm485 = vcmp.ge.s32.totalorder %v469, 16
      %vm486 = vcmp.lt.s32.totalorder %v469, 18
      %vm487 = vmand %vm485, %vm486
      %vm488 = vcmp.ge.s32.totalorder %v469, 18
      %vm489 = vcmp.lt.s32.totalorder %v469, 21
      %vm490 = vmand %vm488, %vm489
      %v491 = vsel %vm472, 1, 0
      %v492 = vcvt.s32.f32 %v491
      %v493 = vsel %vm475, 1, 0
      %v494 = vcvt.s32.f32 %v493
      %v495 = vsel %vm478, 1, 0
      %v496 = vcvt.s32.f32 %v495
      %v497 = vsel %vm481, 1, 0
      %v498 = vcvt.s32.f32 %v497
      %v499 = vsel %vm484, 1, 0
      %v500 = vcvt.s32.f32 %v499
      %v501 = vsel %vm487, 1, 0
      %v502 = vcvt.s32.f32 %v501
      %v503 = vsel %vm490, 1, 0
      %v504 = vcvt.s32.f32 %v503
      %vm505 = vcmp.eq.s32.totalorder %v491, 1
      %v506 = vsel %vm505, %v465, -inf
      %vm507 = vcmask 261120
      %v508 = vsel %vm507, %v506, -inf
      %509 = vmax.xlane.f32.xlu0 %v508
      %v510 = vpop.xlane.xlu0 %509
      %v511 = vmul.f32 %v510, %v492
      %v512 = vadd.f32 %v511, 0.0
      %vm513 = vcmp.eq.s32.totalorder %v493, 1
      %v514 = vsel %vm513, %v465, -inf
      %v515 = vsel %vm507, %v514, -inf
      %516 = vmax.xlane.f32.xlu0 %v515
      %v517 = vpop.xlane.xlu0 %516
      %v518 = vmul.f32 %v517, %v494
      %v519 = vadd.f32 %v512, %v518
      %vm520 = vcmp.eq.s32.totalorder %v495, 1
      %v521 = vsel %vm520, %v465, -inf
      %v522 = vsel %vm507, %v521, -inf
      %523 = vmax.xlane.f32.xlu0 %v522
      %v524 = vpop.xlane.xlu0 %523
      %v525 = vmul.f32 %v524, %v496
      %v526 = vadd.f32 %v519, %v525
      %vm527 = vcmp.eq.s32.totalorder %v497, 1
      %v528 = vsel %vm527, %v465, -inf
      %v529 = vsel %vm507, %v528, -inf
      %530 = vmax.xlane.f32.xlu0 %v529
      %v531 = vpop.xlane.xlu0 %530
      %v532 = vmul.f32 %v531, %v498
      %v533 = vadd.f32 %v526, %v532
      %vm534 = vcmp.eq.s32.totalorder %v499, 1
      %v535 = vsel %vm534, %v465, -inf
      %v536 = vsel %vm507, %v535, -inf
      %537 = vmax.xlane.f32.xlu0 %v536
      %v538 = vpop.xlane.xlu0 %537
      %v539 = vmul.f32 %v538, %v500
      %v540 = vadd.f32 %v533, %v539
      %vm541 = vcmp.eq.s32.totalorder %v501, 1
      %v542 = vsel %vm541, %v465, -inf
      %v543 = vsel %vm507, %v542, -inf
      %544 = vmax.xlane.f32.xlu0 %v543
      %v545 = vpop.xlane.xlu0 %544
      %v546 = vmul.f32 %v545, %v502
      %v547 = vadd.f32 %v540, %v546
      %vm548 = vcmp.eq.s32.totalorder %v503, 1
      %v549 = vsel %vm548, %v465, -inf
      %v550 = vsel %vm507, %v549, -inf
      %551 = vmax.xlane.f32.xlu0 %v550
      %v552 = vpop.xlane.xlu0 %551
      %v553 = vmul.f32 %v552, %v504
      %v554 = vadd.f32 %v547, %v553
      %v555 = vsub.f32 %v465, %v554
      %v556 = vmul.f32 %v555, 1.442695
      %v557 = vpow.pop %v556
      %v558 = vmul.f32 %v557, %v492
      %v559 = vsel %vm507, %v558, 0.0
      %560 = vadd.xlane.f32.xlu0 %v559
      %v561 = vpop.xlane.xlu0 %560
      %v562 = vlog2.pop %v561
      %v563 = vmul.f32 %v562, 0.6931472
      %v564 = vmul.f32 %v563, %v492
      %v565 = vadd.f32 %v564, 0.0
      %v566 = vmul.f32 %v557, %v494
      %v567 = vsel %vm507, %v566, 0.0
      %568 = vadd.xlane.f32.xlu0 %v567
      %v569 = vpop.xlane.xlu0 %568
      %v570 = vlog2.pop %v569
      %v571 = vmul.f32 %v570, 0.6931472
      %v572 = vmul.f32 %v571, %v494
      %v573 = vadd.f32 %v565, %v572
      %v574 = vmul.f32 %v557, %v496
      %v575 = vsel %vm507, %v574, 0.0
      %576 = vadd.xlane.f32.xlu0 %v575
      %v577 = vpop.xlane.xlu0 %576
      %v578 = vlog2.pop %v577
      %v579 = vmul.f32 %v578, 0.6931472
      %v580 = vmul.f32 %v579, %v496
      %v581 = vadd.f32 %v573, %v580
      %v582 = vmul.f32 %v557, %v498
      %v583 = vsel %vm507, %v582, 0.0
      %584 = vadd.xlane.f32.xlu0 %v583
      %v585 = vpop.xlane.xlu0 %584
      %v586 = vlog2.pop %v585
      %v587 = vmul.f32 %v586, 0.6931472
      %v588 = vmul.f32 %v587, %v498
      %v589 = vadd.f32 %v581, %v588
      %v590 = vmul.f32 %v557, %v500
      %v591 = vsel %vm507, %v590, 0.0
      %592 = vadd.xlane.f32.xlu0 %v591
      %v593 = vpop.xlane.xlu0 %592
      %v594 = vlog2.pop %v593
      %v595 = vmul.f32 %v594, 0.6931472
      %v596 = vmul.f32 %v595, %v500
      %v597 = vadd.f32 %v589, %v596
      %v598 = vmul.f32 %v557, %v502
      %v599 = vsel %vm507, %v598, 0.0
      %600 = vadd.xlane.f32.xlu0 %v599
      %v601 = vpop.xlane.xlu0 %600
      %v602 = vlog2.pop %v601
      %v603 = vmul.f32 %v602, 0.6931472
      %v604 = vmul.f32 %v603, %v502
      %v605 = vadd.f32 %v597, %v604
      %v606 = vmul.f32 %v557, %v504
      %v607 = vsel %vm507, %v606, 0.0
      %608 = vadd.xlane.f32.xlu0 %v607
      %v609 = vpop.xlane.xlu0 %608
      %v610 = vlog2.pop %v609
      %v611 = vmul.f32 %v610, 0.6931472
      %v612 = vmul.f32 %v611, %v504
      %v613 = vadd.f32 %v605, %v612
      %v614 = vsub.f32 %v555, %v613
      %615 = vst.msk [vmem:[%s222] sm:$0xff] %vm507, %v614
      %p616 = scmp.lt.s32.totalorder %s16, 1
      %s617 = scalar_select %p616, %s16, 1
      %s618 = smul.addr %s617, 8
      %s619 = scalar_lea.vmem %s5, %s618
      // Predicated region
      $region41: #{_forward_b_core.1} parent=39 // pred_check
        %p620 = pneg %p144
      $region42: #{_forward_b_core.1} parent=39 // pred_check_branch
        %622 = sbr.rel (%p620) target = $region44
      $region43: #{_forward_b_core.1} parent=39 // pred_region
        _
      $region44: #{_forward_b_core.1} parent=39 // pred_fallthru
        _
    $region40: #{_forward_b_core.1} parent=5 // pred_fallthru
      _
    %p623 = scmp.le.s32.totalorder 2, %s11
    // Predicated region
    $region45: #{_forward_b_core.1} parent=5 // pred_check
      %p624 = pneg %p623
    $region46: #{_forward_b_core.1} parent=5 // pred_check_branch
      %626 = sbr.rel (%p624) target = $region48
    $region47: #{_forward_b_core.1} parent=5 // pred_region
      %s627 = ssub.s32 %s11, 2
      // Predicated region
      $region49: #{_forward_b_core.1} parent=47 // pred_check
        %p628 = pneg %p150
      $region50: #{_forward_b_core.1} parent=47 // pred_check_branch
        %630 = sbr.rel (%p628) target = $region52
      $region51: #{_forward_b_core.1} parent=47 // pred_region
        %p631 = scmp.lt.s32.totalorder %s17, 1
        %s632 = scalar_select %p631, %s17, 1
        %s633 = smul.addr %s632, 8
        %s634 = scalar_lea.vmem %s5, %s633
      $region52: #{_forward_b_core.1} parent=47 // pred_fallthru
        _
    $region48: #{_forward_b_core.1} parent=5 // pred_fallthru
      _
  $region6: #{_forward_b_core.1} parent=0 // loop_footer
    %s15 = sadd.s32 1, %s11
  $region7: #{_forward_b_core.1} parent=0 // loop_footer_branch
    %10 = sbr.rel target = $region3
  $region8: #{_forward_b_core.1} parent=0 // loop_exit
    _

</llo_original>
